<compile_context>
chip_gen: v5e
topology: v5e:2x2
jax: 0.10.0
libtpu: 0.0.40
codegen_flags: <defaults>
</compile_context>

<pallas_src>
import functools
import math

import jax
import jax.numpy as jnp
from jax.experimental import pallas as pl
from jax.experimental.pallas import tpu as pltpu

_LANE = 128
_SUBLANE = 8


def _round_up(v, m):
    return (v + m - 1) // m * m


def _pow2_floor(v):
    return 1 << (int(v).bit_length() - 1)


def _vmem_capacity_bytes():
    """Physical VMEM per core; conservative v7x fallback if the query fails."""
    try:
        info = pltpu.get_tpu_info()
        cap = int(getattr(info, "vmem_capacity_bytes", 0) or 0)
        if cap > 0:
            return cap
    except Exception:
        pass
    return 64 * 1024 * 1024


def _choose_tiling(B, C, hidden, HW, itemsize, x_dbuf_budget, const_budget):
    """Pick (Bc, hw_tile).

    Bc: largest divisor of B with sublane-aligned packed rows (Bc*C % 8 == 0)
        whose constant blocks fit `const_budget`, preferring >= 2 chunks so the
        "parallel" grid axis can split across v7x's two TensorCores (the HW
        axis is a reduction and cannot be core-split).
    hw_tile: largest 128 * 2**k whose double-buffered (Bc*C, hw_tile) block
        fits `x_dbuf_budget`, capped near the full (lane-rounded) HW row.
        Power-of-two so the in-kernel halving-tree reduce stays lane-aligned.
    """
    lane_hw = _round_up(max(HW, 1), _LANE)
    hw_cap = _LANE * int(pl.next_power_of_2(lane_hw // _LANE))

    def fit_hw(bc):
        per_buf = x_dbuf_budget // 2                     # x is double-buffered
        max_lanes = per_buf // max(bc * C * itemsize, 1)
        if max_lanes < _LANE:
            return 0
        return min(_LANE * _pow2_floor(max_lanes // _LANE), hw_cap)

    def consts_ok(bc):
        bcc = bc * C
        return 4 * (bc * bcc + bcc * hidden) <= const_budget   # sel_b + W1p

    aligned = [bc for bc in range(1, B + 1)
               if B % bc == 0 and (bc * C) % _SUBLANE == 0 and consts_ok(bc)]

    def best(cands):
        for bc in sorted(cands, reverse=True):
            hw = fit_hw(bc)
            if hw >= _LANE:
                return bc, hw
        return None

    choice = None
    if B >= 2:
        choice = best([bc for bc in aligned if B // bc >= 2])
    if choice is None:
        choice = best(aligned)
    if choice is None:
        # Unaligned fallback: a block first-dim equal to the full array dim is
        # always legal. (If alignment forces a single chunk, one v7x core
        # idles on the batch axis; acceptable for small B.)
        choice = (B, max(fit_hw(B), _LANE))
    return choice


def _attention2d_kernel(x_ref, w1p_ref, w2_ref, b2_ref, selb_ref,
                        o_ref, acc_ref, *,
                        hw_total, hw_tile, num_hw_steps, inv_temp):
    s = pl.program_id(1)
    last = num_hw_steps - 1

    @pl.when(s == 0)
    def _init():
        acc_ref[...] = jnp.zeros_like(acc_ref)

    def _accumulate(tile):
        # Lane-aligned halving tree: (BcC, hw_tile) -> (BcC, 128) using only
        # VPU adds (hw_tile is 128 * 2**k, so every slice boundary stays on a
        # lane-tile boundary -> no relayout, no per-tile cross-lane XLU reduce,
        # lane-dense accumulator store).
        w = hw_tile
        while w > _LANE:
            half = w // 2
            tile = tile[:, :half] + tile[:, half:w]
            w = half
        acc_ref[...] += tile[:, :_LANE]

    if hw_total % hw_tile != 0:
        # Steady-state fast path: full tiles, no mask work.
        @pl.when(s < last)
        def _full():
            _accumulate(x_ref[...].astype(jnp.float32))

        # Last (partial) tile only: zero out-of-range lanes before accumulating.
        @pl.when(s == last)
        def _partial():
            tile = x_ref[...].astype(jnp.float32)
            valid = hw_total - last * hw_tile                      # static
            col = jax.lax.broadcasted_iota(jnp.int32, tile.shape, 1)
            _accumulate(jnp.where(col < valid, tile, 0.0))
    else:
        _accumulate(x_ref[...].astype(jnp.float32))

    # Epilogue: tiny matmuls + softmax, once per batch chunk.
    @pl.when(s == last)
    def _finalize():
        # Single cross-lane reduce of the widened accumulator -> per-row sums.
        pooled_col = jnp.sum(acc_ref[...], axis=-1, keepdims=True)  # (BcC, 1)
        # fc1 (1x1 conv, no bias) + ReLU. The 1/HW mean scale and the packed
        # column -> (Bc, C) unscatter are folded into W1p / sel_b (wrapper).
        h = jnp.dot(selb_ref[...], pooled_col * w1p_ref[...],
                    preferred_element_type=jnp.float32)             # (Bc, hidden)
        h = jnp.maximum(h, 0.0)
        # fc2 (1x1 conv, bias) -> temperature-scaled softmax over K.
        logits = jnp.dot(h, w2_ref[...], preferred_element_type=jnp.float32)
        logits = (logits + b2_ref[...]) * inv_temp                  # (Bc, K)
        m = jnp.max(logits, axis=-1, keepdims=True)
        e = jnp.exp(logits - m)
        o_ref[...] = (e / jnp.sum(e, axis=-1, keepdims=True)).astype(o_ref.dtype)


def attention2d_forward(x, w1, w2, b2, temperature):
    """x: (B,C,H,W); w1: (hidden,C,1,1); w2: (K,hidden,1,1); b2: (K,)."""
    B, C, H, W = x.shape
    hidden = w1.shape[0]
    K = w2.shape[0]
    HW = H * W

    # Generation-derived budgets: v5e/v6e (128 MiB VMEM) -> 96 MiB limit /
    # 64 MiB x double-buffer; v7x (64 MiB/TC) -> 48 MiB limit / 32 MiB budget.
    vmem_cap = _vmem_capacity_bytes()
    vmem_limit = min(vmem_cap * 3 // 4, 96 * 1024 * 1024)
    x_dbuf_budget = max(vmem_limit * 2 // 3, 8 * 1024 * 1024)
    const_budget = max(vmem_limit // 8, 1 * 1024 * 1024)

    itemsize = jnp.dtype(x.dtype).itemsize
    Bc, hw_tile = _choose_tiling(B, C, hidden, HW, itemsize,
                                 x_dbuf_budget, const_budget)
    BcC = Bc * C
    NB = B // Bc
    NS = int(pl.cdiv(HW, hw_tile))

    # Layout plumbing (pure reshapes / tiny constants, done once in XLA).
    x2d = x.reshape(B * C, HW)                                  # row = b*C + c
    w1_t = w1.reshape(hidden, C).astype(jnp.float32).T          # (C, hidden)
    # fc1 weight with the per-channel unscatter (old sel_c) and the 1/HW mean
    # scale folded in: W1p[r, j] = w1_t[r % C, j] / HW.
    w1p = jnp.tile(w1_t, (Bc, 1)) * (1.0 / float(HW))           # (BcC, hidden)
    w2_t = w2.reshape(K, hidden).astype(jnp.float32).T          # (hidden, K)
    b2_row = b2.reshape(1, K).astype(jnp.float32)
    # Batch unscatter: sel_b @ v sums each group of C consecutive packed rows.
    rows = jnp.arange(BcC)
    sel_b = (rows[None, :] // C == jnp.arange(Bc)[:, None]).astype(jnp.float32)

    kernel = functools.partial(_attention2d_kernel,
                               hw_total=HW, hw_tile=hw_tile, num_hw_steps=NS,
                               inv_temp=1.0 / float(temperature))

    def run(single_buffer_consts):
        const_kwargs = (dict(pipeline_mode=pl.Buffered(1))
                        if single_buffer_consts else {})

        def const_spec(shape):
            return pl.BlockSpec(shape, lambda bb, s: (0, 0), **const_kwargs)

        grid_spec = pltpu.PrefetchScalarGridSpec(
            num_scalar_prefetch=0,
            grid=(NB, NS),
            in_specs=[
                pl.BlockSpec((BcC, hw_tile), lambda bb, s: (bb, s)),  # x tiles
                const_spec((BcC, hidden)),                            # W1p
                const_spec((hidden, K)),                              # fc2 weight
                const_spec((1, K)),                                   # fc2 bias
                const_spec((Bc, BcC)),                                # sel_b
            ],
            out_specs=pl.BlockSpec((None, Bc, K), lambda bb, s: (bb, 0, 0)),
            scratch_shapes=[pltpu.VMEM((BcC, _LANE), jnp.float32)],
        )
        return pl.pallas_call(
            kernel,
            out_shape=jax.ShapeDtypeStruct((NB, Bc, K), jnp.float32),
            grid_spec=grid_spec,
            compiler_params=pltpu.CompilerParams(
                dimension_semantics=("parallel", "arbitrary"),
                vmem_limit_bytes=int(vmem_limit)),
        )(x2d, w1p, w2_t, b2_row, sel_b)

    try:
        out3 = run(single_buffer_consts=True)
    except Exception:
        # pipeline_mode / Buffered(1) support varies by JAX version; constants
        # are tiny after the sel_c fold, so default double-buffering is an
        # acceptable fallback that keeps the kernel runnable.
        out3 = run(single_buffer_consts=False)

    return out3.reshape(B, K)


def _reference(x, w1, w2, b2, temperature):
    # Pure-JAX reference of the PyTorch forward.
    B, C, H, W = x.shape
    hidden = w1.shape[0]
    K = w2.shape[0]
    pooled = jnp.mean(x.reshape(B, C, H * W), axis=-1)
    h = jnp.maximum(pooled @ w1.reshape(hidden, C).T, 0.0)
    logits = h @ w2.reshape(K, hidden).T + b2.reshape(1, K)
    return jax.nn.softmax(logits / float(temperature), axis=1)


def _kaiming_normal_fan_out(key, out_ch, in_ch):
    # nn.init.kaiming_normal_(w, mode='fan_out', nonlinearity='relu'), 1x1 conv.
    std = math.sqrt(2.0) / math.sqrt(out_ch)
    return jax.random.normal(key, (out_ch, in_ch, 1, 1), dtype=jnp.float32) * std


if __name__ == "__main__":
    # Module config consistent with attention2d.__init__ (temperature % 3 == 1).
    in_planes = 4
    ratios = 0.25
    K = 4
    temperature = 4
    hidden_planes = int(in_planes * ratios) + 1    # in_planes != 3 branch -> 2

    key = jax.random.PRNGKey(0)
    kx, k1, k2 = jax.random.split(key, 3)

    w1 = _kaiming_normal_fan_out(k1, hidden_planes, in_planes)   # fc1.weight
    w2 = _kaiming_normal_fan_out(k2, K, hidden_planes)           # fc2.weight
    b2 = jnp.zeros((K,), dtype=jnp.float32)                      # fc2.bias = 0

    x = jax.random.normal(kx, (2, in_planes, 16, 16), dtype=jnp.float32)

    out = attention2d_forward(x, w1, w2, b2, temperature)
    out = jax.block_until_ready(out)
    ref = _reference(x, w1, w2, b2, temperature)

    assert out.shape == (2, K)
    assert bool(jnp.allclose(jnp.sum(out, axis=1), 1.0, atol=1e-4))
    assert bool(jnp.allclose(out, ref, atol=2e-3, rtol=2e-3))

    print("KERNEL_OK")
</pallas_src>

<mosaic_0001>
module attributes {stable_mosaic.version = 11 : i64} {
  func.func @_attention2d_kernel(%arg0: i32, %arg1: i32, %arg2: memref<8x256xf32, #tpu.memory_space<vmem>>, %arg3: memref<8x2xf32, #tpu.memory_space<vmem>>, %arg4: memref<2x4xf32, #tpu.memory_space<vmem>>, %arg5: memref<1x4xf32, #tpu.memory_space<vmem>>, %arg6: memref<2x8xf32, #tpu.memory_space<vmem>>, %arg7: memref<1x2x4xf32, #tpu.memory_space<vmem>>, %arg8: memref<8x128xf32, #tpu.memory_space<vmem>>) attributes {dimension_semantics = [#tpu.dimension_semantics<parallel>, #tpu.dimension_semantics<arbitrary>], iteration_bounds = array<i64: 1, 1>, scalar_prefetch = 0 : i64, scratch_operands = 1 : i64, tpu.core_type = #tpu.core_type<tc>, window_params = [{transform_indices = @transform_0, window_bounds = array<i64: 8, 256>}, {pipeline_mode = #tpu.pipeline_mode<synchronous>, transform_indices = @transform_1, window_bounds = array<i64: 8, 2>}, {pipeline_mode = #tpu.pipeline_mode<synchronous>, transform_indices = @transform_2, window_bounds = array<i64: 2, 4>}, {pipeline_mode = #tpu.pipeline_mode<synchronous>, transform_indices = @transform_3, window_bounds = array<i64: 1, 4>}, {pipeline_mode = #tpu.pipeline_mode<synchronous>, transform_indices = @transform_4, window_bounds = array<i64: 2, 8>}, {transform_indices = @transform_5, window_bounds = array<i64: 1, 2, 4>}]} {
    %c0_i32 = arith.constant 0 : i32
    %0 = arith.cmpi eq, %arg1, %c0_i32 : i32
    %1 = arith.extui %0 : i1 to i32
    %c0_i32_0 = arith.constant 0 : i32
    %2 = arith.cmpi ne, %1, %c0_i32_0 : i32
    scf.if %2 {
      %cst = arith.constant 0.000000e+00 : f32
      %13 = vector.broadcast %cst : f32 to vector<8x128xf32>
      %c0_8 = arith.constant 0 : index
      %c0_9 = arith.constant 0 : index
      %14 = vector.load %arg8[%c0_8, %c0_9] : memref<8x128xf32, #tpu.memory_space<vmem>>, vector<8x128xf32>
      tpu.vector_store %arg8[%c0_8, %c0_9], %13 {strides = array<i32>} : memref<8x128xf32, #tpu.memory_space<vmem>>, vector<8x128xf32>,
    } else {
    }
    %c0 = arith.constant 0 : index
    %c0_1 = arith.constant 0 : index
    %3 = vector.load %arg2[%c0, %c0_1] : memref<8x256xf32, #tpu.memory_space<vmem>>, vector<8x256xf32>
    %4 = vector.extract_strided_slice %3 {offsets = [0, 0], sizes = [8, 128], strides = [1, 1]} : vector<8x256xf32> to vector<8x128xf32>
    %5 = vector.extract_strided_slice %3 {offsets = [0, 128], sizes = [8, 128], strides = [1, 1]} : vector<8x256xf32> to vector<8x128xf32>
    %6 = arith.addf %4, %5 : vector<8x128xf32>
    %c0_2 = arith.constant 0 : index
    %c0_3 = arith.constant 0 : index
    %7 = vector.load %arg8[%c0_2, %c0_3] : memref<8x128xf32, #tpu.memory_space<vmem>>, vector<8x128xf32>
    %8 = arith.addf %7, %6 : vector<8x128xf32>
    %c0_4 = arith.constant 0 : index
    %c0_5 = arith.constant 0 : index
    %9 = vector.load %arg8[%c0_4, %c0_5] : memref<8x128xf32, #tpu.memory_space<vmem>>, vector<8x128xf32>
    tpu.vector_store %arg8[%c0_4, %c0_5], %8 {strides = array<i32>} : memref<8x128xf32, #tpu.memory_space<vmem>>, vector<8x128xf32>,
    %c0_i32_6 = arith.constant 0 : i32
    %10 = arith.cmpi eq, %arg1, %c0_i32_6 : i32
    %11 = arith.extui %10 : i1 to i32
    %c0_i32_7 = arith.constant 0 : i32
    %12 = arith.cmpi ne, %11, %c0_i32_7 : i32
    scf.if %12 {
      %c0_8 = arith.constant 0 : index
      %c0_9 = arith.constant 0 : index
      %13 = vector.load %arg8[%c0_8, %c0_9] : memref<8x128xf32, #tpu.memory_space<vmem>>, vector<8x128xf32>
      %cst = arith.constant dense<0.000000e+00> : vector<8xf32>
      %14 = vector.multi_reduction <add>, %13, %cst [1] : vector<8x128xf32> to vector<8xf32>
      %15 = vector.shape_cast %14 : vector<8xf32> to vector<8x1xf32>
      %c0_10 = arith.constant 0 : index
      %c0_11 = arith.constant 0 : index
      %16 = vector.load %arg6[%c0_10, %c0_11] : memref<2x8xf32, #tpu.memory_space<vmem>>, vector<2x8xf32>
      %c0_12 = arith.constant 0 : index
      %c0_13 = arith.constant 0 : index
      %17 = vector.load %arg3[%c0_12, %c0_13] : memref<8x2xf32, #tpu.memory_space<vmem>>, vector<8x2xf32>
      %18 = vector.broadcast %15 : vector<8x1xf32> to vector<8x2xf32>
      %19 = arith.mulf %18, %17 : vector<8x2xf32>
      %cst_14 = arith.constant dense<0.000000e+00> : vector<2x2xf32>
      %20 = tpu.matmul %16, %19, %cst_14 {dimension_numbers = #tpu.dot_dimension_numbers<[1], [0], [0], [1], [0, 0, 1, 1], [], []>} : vector<2x8xf32>, vector<8x2xf32>, vector<2x2xf32> -> vector<2x2xf32>
      %cst_15 = arith.constant 0.000000e+00 : f32
      %21 = vector.broadcast %cst_15 : f32 to vector<2x2xf32>
      %22 = arith.maximumf %20, %21 : vector<2x2xf32>
      %c0_16 = arith.constant 0 : index
      %c0_17 = arith.constant 0 : index
      %23 = vector.load %arg4[%c0_16, %c0_17] : memref<2x4xf32, #tpu.memory_space<vmem>>, vector<2x4xf32>
      %cst_18 = arith.constant dense<0.000000e+00> : vector<2x4xf32>
      %24 = tpu.matmul %22, %23, %cst_18 {dimension_numbers = #tpu.dot_dimension_numbers<[1], [0], [0], [1], [0, 0, 1, 1], [], []>} : vector<2x2xf32>, vector<2x4xf32>, vector<2x4xf32> -> vector<2x4xf32>
      %c0_19 = arith.constant 0 : index
      %c0_20 = arith.constant 0 : index
      %25 = vector.load %arg5[%c0_19, %c0_20] : memref<1x4xf32, #tpu.memory_space<vmem>>, vector<1x4xf32>
      %26 = vector.broadcast %25 : vector<1x4xf32> to vector<2x4xf32>
      %27 = arith.addf %24, %26 : vector<2x4xf32>
      %cst_21 = arith.constant 2.500000e-01 : f32
      %28 = vector.broadcast %cst_21 : f32 to vector<2x4xf32>
      %29 = arith.mulf %27, %28 : vector<2x4xf32>
      %cst_22 = arith.constant dense<0xFF800000> : vector<2xf32>
      %30 = vector.multi_reduction <maximumf>, %29, %cst_22 [1] : vector<2x4xf32> to vector<2xf32>
      %31 = vector.shape_cast %30 : vector<2xf32> to vector<2x1xf32>
      %32 = vector.broadcast %31 : vector<2x1xf32> to vector<2x4xf32>
      %33 = arith.subf %29, %32 : vector<2x4xf32>
      %34 = math.exp %33 : vector<2x4xf32>
      %cst_23 = arith.constant dense<0.000000e+00> : vector<2xf32>
      %35 = vector.multi_reduction <add>, %34, %cst_23 [1] : vector<2x4xf32> to vector<2xf32>
      %36 = vector.shape_cast %35 : vector<2xf32> to vector<2x1xf32>
      %37 = vector.broadcast %36 : vector<2x1xf32> to vector<2x4xf32>
      %38 = arith.divf %34, %37 : vector<2x4xf32>
      %c0_24 = arith.constant 0 : index
      %c0_25 = arith.constant 0 : index
      %c0_26 = arith.constant 0 : index
      %39 = vector.load %arg7[%c0_24, %c0_25, %c0_26] : memref<1x2x4xf32, #tpu.memory_space<vmem>>, vector<1x2x4xf32>
      %40 = vector.shape_cast %39 : vector<1x2x4xf32> to vector<2x4xf32>
      %41 = vector.shape_cast %38 : vector<2x4xf32> to vector<1x2x4xf32>
      tpu.vector_store %arg7[%c0_24, %c0_25, %c0_26], %41 {strides = array<i32>} : memref<1x2x4xf32, #tpu.memory_space<vmem>>, vector<1x2x4xf32>,
    } else {
    }
    return
  }
  func.func @transform_0(%arg0: i32, %arg1: i32) -> (i32, i32) {
    %c0_i32 = arith.constant 0 : i32
    return %arg0, %arg1 : i32, i32
  }
  func.func @transform_1(%arg0: i32, %arg1: i32) -> (i32, i32) {
    %c0_i32 = arith.constant 0 : i32
    %c0_i32_0 = arith.constant 0 : i32
    %c0_i32_1 = arith.constant 0 : i32
    return %c0_i32, %c0_i32_0 : i32, i32
  }
  func.func @transform_2(%arg0: i32, %arg1: i32) -> (i32, i32) {
    %c0_i32 = arith.constant 0 : i32
    %c0_i32_0 = arith.constant 0 : i32
    %c0_i32_1 = arith.constant 0 : i32
    return %c0_i32, %c0_i32_0 : i32, i32
  }
  func.func @transform_3(%arg0: i32, %arg1: i32) -> (i32, i32) {
    %c0_i32 = arith.constant 0 : i32
    %c0_i32_0 = arith.constant 0 : i32
    %c0_i32_1 = arith.constant 0 : i32
    return %c0_i32, %c0_i32_0 : i32, i32
  }
  func.func @transform_4(%arg0: i32, %arg1: i32) -> (i32, i32) {
    %c0_i32 = arith.constant 0 : i32
    %c0_i32_0 = arith.constant 0 : i32
    %c0_i32_1 = arith.constant 0 : i32
    return %c0_i32, %c0_i32_0 : i32, i32
  }
  func.func @transform_5(%arg0: i32, %arg1: i32) -> (i32, i32, i32) {
    %c0_i32 = arith.constant 0 : i32
    %c0_i32_0 = arith.constant 0 : i32
    %c0_i32_1 = arith.constant 0 : i32
    return %arg0, %c0_i32, %c0_i32_0 : i32, i32, i32
  }
}

module attributes {stable_mosaic.version = 11 : i64} {
  func.func @_attention2d_kernel(%arg0: i32, %arg1: i32, %arg2: memref<8x256xf32, #tpu.memory_space<vmem>>, %arg3: memref<8x2xf32, #tpu.memory_space<vmem>>, %arg4: memref<2x4xf32, #tpu.memory_space<vmem>>, %arg5: memref<1x4xf32, #tpu.memory_space<vmem>>, %arg6: memref<2x8xf32, #tpu.memory_space<vmem>>, %arg7: memref<1x2x4xf32, #tpu.memory_space<vmem>>, %arg8: memref<8x128xf32, #tpu.memory_space<vmem>>) attributes {dimension_semantics = [#tpu.dimension_semantics<parallel>, #tpu.dimension_semantics<arbitrary>], iteration_bounds = array<i64: 1, 1>, scalar_prefetch = 0 : i64, scratch_operands = 1 : i64, tpu.core_type = #tpu.core_type<tc>, window_params = [{transform_indices = @transform_0, window_bounds = array<i64: 8, 256>}, {pipeline_mode = #tpu.pipeline_mode<synchronous>, transform_indices = @transform_1, window_bounds = array<i64: 8, 2>}, {pipeline_mode = #tpu.pipeline_mode<synchronous>, transform_indices = @transform_2, window_bounds = array<i64: 2, 4>}, {pipeline_mode = #tpu.pipeline_mode<synchronous>, transform_indices = @transform_3, window_bounds = array<i64: 1, 4>}, {pipeline_mode = #tpu.pipeline_mode<synchronous>, transform_indices = @transform_4, window_bounds = array<i64: 2, 8>}, {transform_indices = @transform_5, window_bounds = array<i64: 1, 2, 4>}]} {
    %c0_i32 = arith.constant 0 : i32
    %0 = arith.cmpi eq, %arg1, %c0_i32 : i32
    %1 = arith.extui %0 : i1 to i32
    %c0_i32_0 = arith.constant 0 : i32
    %2 = arith.cmpi ne, %1, %c0_i32_0 : i32
    scf.if %2 {
      %cst = arith.constant 0.000000e+00 : f32
      %13 = vector.broadcast %cst : f32 to vector<8x128xf32>
      %c0_8 = arith.constant 0 : index
      %c0_9 = arith.constant 0 : index
      %14 = vector.load %arg8[%c0_8, %c0_9] : memref<8x128xf32, #tpu.memory_space<vmem>>, vector<8x128xf32>
      tpu.vector_store %arg8[%c0_8, %c0_9], %13 {strides = array<i32>} : memref<8x128xf32, #tpu.memory_space<vmem>>, vector<8x128xf32>,
    } else {
    }
    %c0 = arith.constant 0 : index
    %c0_1 = arith.constant 0 : index
    %3 = vector.load %arg2[%c0, %c0_1] : memref<8x256xf32, #tpu.memory_space<vmem>>, vector<8x256xf32>
    %4 = vector.extract_strided_slice %3 {offsets = [0, 0], sizes = [8, 128], strides = [1, 1]} : vector<8x256xf32> to vector<8x128xf32>
    %5 = vector.extract_strided_slice %3 {offsets = [0, 128], sizes = [8, 128], strides = [1, 1]} : vector<8x256xf32> to vector<8x128xf32>
    %6 = arith.addf %4, %5 : vector<8x128xf32>
    %c0_2 = arith.constant 0 : index
    %c0_3 = arith.constant 0 : index
    %7 = vector.load %arg8[%c0_2, %c0_3] : memref<8x128xf32, #tpu.memory_space<vmem>>, vector<8x128xf32>
    %8 = arith.addf %7, %6 : vector<8x128xf32>
    %c0_4 = arith.constant 0 : index
    %c0_5 = arith.constant 0 : index
    %9 = vector.load %arg8[%c0_4, %c0_5] : memref<8x128xf32, #tpu.memory_space<vmem>>, vector<8x128xf32>
    tpu.vector_store %arg8[%c0_4, %c0_5], %8 {strides = array<i32>} : memref<8x128xf32, #tpu.memory_space<vmem>>, vector<8x128xf32>,
    %c0_i32_6 = arith.constant 0 : i32
    %10 = arith.cmpi eq, %arg1, %c0_i32_6 : i32
    %11 = arith.extui %10 : i1 to i32
    %c0_i32_7 = arith.constant 0 : i32
    %12 = arith.cmpi ne, %11, %c0_i32_7 : i32
    scf.if %12 {
      %c0_8 = arith.constant 0 : index
      %c0_9 = arith.constant 0 : index
      %13 = vector.load %arg8[%c0_8, %c0_9] : memref<8x128xf32, #tpu.memory_space<vmem>>, vector<8x128xf32>
      %cst = arith.constant dense<0.000000e+00> : vector<8xf32>
      %14 = vector.multi_reduction <add>, %13, %cst [1] : vector<8x128xf32> to vector<8xf32>
      %15 = vector.shape_cast %14 : vector<8xf32> to vector<8x1xf32>
      %c0_10 = arith.constant 0 : index
      %c0_11 = arith.constant 0 : index
      %16 = vector.load %arg6[%c0_10, %c0_11] : memref<2x8xf32, #tpu.memory_space<vmem>>, vector<2x8xf32>
      %c0_12 = arith.constant 0 : index
      %c0_13 = arith.constant 0 : index
      %17 = vector.load %arg3[%c0_12, %c0_13] : memref<8x2xf32, #tpu.memory_space<vmem>>, vector<8x2xf32>
      %18 = vector.broadcast %15 : vector<8x1xf32> to vector<8x2xf32>
      %19 = arith.mulf %18, %17 : vector<8x2xf32>
      %cst_14 = arith.constant dense<0.000000e+00> : vector<2x2xf32>
      %20 = tpu.matmul %16, %19, %cst_14 {dimension_numbers = #tpu.dot_dimension_numbers<[1], [0], [0], [1], [0, 0, 1, 1], [], []>} : vector<2x8xf32>, vector<8x2xf32>, vector<2x2xf32> -> vector<2x2xf32>
      %cst_15 = arith.constant 0.000000e+00 : f32
      %21 = vector.broadcast %cst_15 : f32 to vector<2x2xf32>
      %22 = arith.maximumf %20, %21 : vector<2x2xf32>
      %c0_16 = arith.constant 0 : index
      %c0_17 = arith.constant 0 : index
      %23 = vector.load %arg4[%c0_16, %c0_17] : memref<2x4xf32, #tpu.memory_space<vmem>>, vector<2x4xf32>
      %cst_18 = arith.constant dense<0.000000e+00> : vector<2x4xf32>
      %24 = tpu.matmul %22, %23, %cst_18 {dimension_numbers = #tpu.dot_dimension_numbers<[1], [0], [0], [1], [0, 0, 1, 1], [], []>} : vector<2x2xf32>, vector<2x4xf32>, vector<2x4xf32> -> vector<2x4xf32>
      %c0_19 = arith.constant 0 : index
      %c0_20 = arith.constant 0 : index
      %25 = vector.load %arg5[%c0_19, %c0_20] : memref<1x4xf32, #tpu.memory_space<vmem>>, vector<1x4xf32>
      %26 = vector.broadcast %25 : vector<1x4xf32> to vector<2x4xf32>
      %27 = arith.addf %24, %26 : vector<2x4xf32>
      %cst_21 = arith.constant 2.500000e-01 : f32
      %28 = vector.broadcast %cst_21 : f32 to vector<2x4xf32>
      %29 = arith.mulf %27, %28 : vector<2x4xf32>
      %cst_22 = arith.constant dense<0xFF800000> : vector<2xf32>
      %30 = vector.multi_reduction <maximumf>, %29, %cst_22 [1] : vector<2x4xf32> to vector<2xf32>
      %31 = vector.shape_cast %30 : vector<2xf32> to vector<2x1xf32>
      %32 = vector.broadcast %31 : vector<2x1xf32> to vector<2x4xf32>
      %33 = arith.subf %29, %32 : vector<2x4xf32>
      %34 = math.exp %33 : vector<2x4xf32>
      %cst_23 = arith.constant dense<0.000000e+00> : vector<2xf32>
      %35 = vector.multi_reduction <add>, %34, %cst_23 [1] : vector<2x4xf32> to vector<2xf32>
      %36 = vector.shape_cast %35 : vector<2xf32> to vector<2x1xf32>
      %37 = vector.broadcast %36 : vector<2x1xf32> to vector<2x4xf32>
      %38 = arith.divf %34, %37 : vector<2x4xf32>
      %c0_24 = arith.constant 0 : index
      %c0_25 = arith.constant 0 : index
      %c0_26 = arith.constant 0 : index
      %39 = vector.load %arg7[%c0_24, %c0_25, %c0_26] : memref<1x2x4xf32, #tpu.memory_space<vmem>>, vector<1x2x4xf32>
      %40 = vector.shape_cast %39 : vector<1x2x4xf32> to vector<2x4xf32>
      %41 = vector.shape_cast %38 : vector<2x4xf32> to vector<1x2x4xf32>
      tpu.vector_store %arg7[%c0_24, %c0_25, %c0_26], %41 {strides = array<i32>} : memref<1x2x4xf32, #tpu.memory_space<vmem>>, vector<1x2x4xf32>,
    } else {
    }
    return
  }
  func.func @transform_0(%arg0: i32, %arg1: i32) -> (i32, i32) {
    %c0_i32 = arith.constant 0 : i32
    return %arg0, %arg1 : i32, i32
  }
  func.func @transform_1(%arg0: i32, %arg1: i32) -> (i32, i32) {
    %c0_i32 = arith.constant 0 : i32
    %c0_i32_0 = arith.constant 0 : i32
    %c0_i32_1 = arith.constant 0 : i32
    return %c0_i32, %c0_i32_0 : i32, i32
  }
  func.func @transform_2(%arg0: i32, %arg1: i32) -> (i32, i32) {
    %c0_i32 = arith.constant 0 : i32
    %c0_i32_0 = arith.constant 0 : i32
    %c0_i32_1 = arith.constant 0 : i32
    return %c0_i32, %c0_i32_0 : i32, i32
  }
  func.func @transform_3(%arg0: i32, %arg1: i32) -> (i32, i32) {
    %c0_i32 = arith.constant 0 : i32
    %c0_i32_0 = arith.constant 0 : i32
    %c0_i32_1 = arith.constant 0 : i32
    return %c0_i32, %c0_i32_0 : i32, i32
  }
  func.func @transform_4(%arg0: i32, %arg1: i32) -> (i32, i32) {
    %c0_i32 = arith.constant 0 : i32
    %c0_i32_0 = arith.constant 0 : i32
    %c0_i32_1 = arith.constant 0 : i32
    return %c0_i32, %c0_i32_0 : i32, i32
  }
  func.func @transform_5(%arg0: i32, %arg1: i32) -> (i32, i32, i32) {
    %c0_i32 = arith.constant 0 : i32
    %c0_i32_0 = arith.constant 0 : i32
    %c0_i32_1 = arith.constant 0 : i32
    return %arg0, %c0_i32, %c0_i32_0 : i32, i32, i32
  }
}

</mosaic_0001>

<llo_original>
// kernel: tpu_custom_call.1
$region0: #{tpu_custom_call.1}
  #allocation0 [shape = 'u32[]', space=smem, size = 0x4, offset = 0x4, fixed_abs, tag = 'smem constant byte address 0x4 - core index']
  #allocation1 [shape = 'u32[72,128]{1,0:T(1,128)}', space=vmem, size = 0x9000, scoped, tag = 'internal scratch']
  #allocation2 [shape = 'f32[8,128]{1,0:T(8,128)}', space=vmem, size = 0x1000, scoped, tag = 'scratch operand']
  %s0 = inlined_call_operand.hbm [shape: f32[8,256], index: 0, kind: input, shape index: {}]
  %s1 = inlined_call_operand.vmem [shape: f32[8,2], index: 1, kind: input, shape index: {}]
  %s2 = inlined_call_operand.vmem [shape: f32[2,4], index: 2, kind: input, shape index: {}]
  %s3 = inlined_call_operand.vmem [shape: f32[1,4], index: 3, kind: input, shape index: {}]
  %s4 = inlined_call_operand.vmem [shape: f32[2,8], index: 4, kind: input, shape index: {}]
  %s5 = inlined_call_operand.hbm [shape: f32[1,2,4], index: 5, kind: output, shape index: {}]
  %s6 = sld [smem:[#allocation0]]
  $region42: #{tpu_custom_call.1} parent=0
    _
  %s8 = ssub.s32 1, %s6
  %s9 = scalar_select 0, %s8, %s6
  $region1: #{tpu_custom_call.1} parent=0
    #allocation3 [shape = 'u8[8192]{0}', space=vmem, size = 0x2000, scoped, tag = 'input window, operand 0, single buffered']
    #allocation4 [shape = 's32[1]{0}', space=sflag, size = 0x4, scoped, tag = 'scoped memory for tpu_custom_call.1']
    #allocation5 [shape = 's32[1]{0}', space=sflag, size = 0x4, scoped, tag = 'scoped memory for tpu_custom_call.1']
    #allocation6 [shape = 'u8[1024]{0}', space=vmem, size = 0x400, scoped, tag = 'output window, operand 0, single buffered']
    %10 = vsyncpa [#allocation4], 0
    %11 = vsyncpa [#allocation5], 0
    // Predicated region
    $region2: #{tpu_custom_call.1} parent=1 // pred_check
      _
    $region3: #{tpu_custom_call.1} parent=1 // pred_check_branch
      %13 = sbr.rel (0) target = $region5
    $region4: #{tpu_custom_call.1} parent=1 // pred_region
      %15 = vsyncadd [#allocation4], 0
      %s17 = sshll.u32 %s0, 4
      %s18 = int_to_ptr.hbm [resolvable:$true] %s17
      %s19 = sshll.u32 [#allocation3], 4
      %s20 = int_to_ptr.vmem [resolvable:$true] %s19
      %22 = dma.hbm_to_vmem [thread:$0]  %s18, 256, %s20, [#allocation4]
    $region5: #{tpu_custom_call.1} parent=1 // pred_fallthru
      _
    // Predicated region
    $region6: #{tpu_custom_call.1} parent=1 // pred_check
      _
    $region7: #{tpu_custom_call.1} parent=1 // pred_check_branch
      %24 = sbr.rel (0) target = $region9
    $region8: #{tpu_custom_call.1} parent=1 // pred_region
      _
    $region9: #{tpu_custom_call.1} parent=1 // pred_fallthru
      _
    // Predicated region
    $region10: #{tpu_custom_call.1} parent=1 // pred_check
      _
    $region11: #{tpu_custom_call.1} parent=1 // pred_check_branch
      %26 = sbr.rel (0) target = $region13
    $region12: #{tpu_custom_call.1} parent=1 // pred_region
      _
    $region13: #{tpu_custom_call.1} parent=1 // pred_fallthru
      _
    // Predicated region
    $region14: #{tpu_custom_call.1} parent=1 // pred_check
      _
    $region15: #{tpu_custom_call.1} parent=1 // pred_check_branch
      %28 = sbr.rel (0) target = $region17
    $region16: #{tpu_custom_call.1} parent=1 // pred_region
      _
    $region17: #{tpu_custom_call.1} parent=1 // pred_fallthru
      _
    // Predicated region
    $region18: #{tpu_custom_call.1} parent=1 // pred_check
      _
    $region19: #{tpu_custom_call.1} parent=1 // pred_check_branch
      %30 = sbr.rel (0) target = $region21
    $region20: #{tpu_custom_call.1} parent=1 // pred_region
      _
    $region21: #{tpu_custom_call.1} parent=1 // pred_fallthru
      _
    // Predicated region
    $region22: #{tpu_custom_call.1} parent=1 // pred_check
      _
    $region23: #{tpu_custom_call.1} parent=1 // pred_check_branch
      %32 = sbr.rel (0) target = $region25
    $region24: #{tpu_custom_call.1} parent=1 // pred_region
      %34 = dma.done [#allocation4], 256
    $region25: #{tpu_custom_call.1} parent=1 // pred_fallthru
      _
    %p35 = scmp.eq.s32.totalorder 0, 0
    // Predicated region
    $region26: #{tpu_custom_call.1} parent=1 // pred_check
      %p36 = pneg %p35
    $region27: #{tpu_custom_call.1} parent=1 // pred_check_branch
      %38 = sbr.rel (%p36) target = $region29
    $region28: #{tpu_custom_call.1} parent=1 // pred_region
      %39 = vst [vmem:[#allocation2] sm:$0xff] 0.0
    $region29: #{tpu_custom_call.1} parent=1 // pred_fallthru
      _
    %v40 = vld [vmem:[#allocation3] sm:$0xff]
    %v41 = vld [vmem:[#allocation3 + $0x8] sm:$0xff]
    %v42 = vadd.f32 %v40, %v41
    %v43 = vld [vmem:[#allocation2] sm:$0xff]
    %v44 = vadd.f32 %v43, %v42
    %45 = vst [vmem:[#allocation2] sm:$0xff] %v44
    // Predicated region
    $region30: #{tpu_custom_call.1} parent=1 // pred_check
      %p46 = pneg %p35
    $region31: #{tpu_custom_call.1} parent=1 // pred_check_branch
      %48 = sbr.rel (%p46) target = $region33
    $region32: #{tpu_custom_call.1} parent=1 // pred_region
      %v49 = vld [vmem:[#allocation2] sm:$0xff]
      %50 = vadd.xlane.f32.xlu0 %v49
      %v51 = vpop.xlane.xlu0 %50
      %v52 = vld [vmem:[%s4] sm:$0x3]
      %v53 = vld [vmem:[%s1] sm:$0xff]
      %v54 = vmul.f32 %v51, %v53
      %vm55 = vcmask 64512
      %v57 = vsel %vm55, %v52, 0
      %59 = vmatpush.msra.mxu0 0.0
      %60 = vmatpush.msra.mxu0 0.0
      %61 = vmatpush.msra.mxu0 0.0
      %62 = vmatpush.msra.mxu0 0.0
      %63 = vmatpush.msra.mxu0 0.0
      %64 = vmatpush.msra.mxu0 0.0
      %65 = vmatpush.msra.mxu0 0.0
      %66 = vmatpush.msra.mxu0 0.0
      %67 = vmatpush.msra.mxu0 0.0
      %68 = vmatpush.msra.mxu0 0.0
      %69 = vmatpush.msra.mxu0 0.0
      %70 = vmatpush.msra.mxu0 0.0
      %71 = vmatpush.msra.mxu0 0.0
      %72 = vmatpush.msra.mxu0 0.0
      %73 = vmatpush.msra.mxu0 0.0
      %74 = vmatpush.msra.mxu0 %v54
      %75 = vmatmul.f32.gmra.mxu0 %v57
      %v76 = vpop.f32.mrf.mxu0
      %v77 = vadd.f32 0.0, %v76
      %78 = vdwg.mxu0
      %v79 = vmax.f32 %v77, 0.0
      %v80 = vld [vmem:[%s2] sm:$0x3]
      %v81 = vld [vmem:[%s3] sm:$0x1]
      %v83 = vperm.slane %v81, 0
      %vm85 = vcmask 15360
      %v87 = vsel %vm85, %v79, 0
      %vm89 = vcmask 1041408
      %v91 = vsel %vm89, %v80, 0
      %93 = vmatpush.msra.mxu0 0.0
      %94 = vmatpush.msra.mxu0 0.0
      %95 = vmatpush.msra.mxu0 0.0
      %96 = vmatpush.msra.mxu0 0.0
      %97 = vmatpush.msra.mxu0 0.0
      %98 = vmatpush.msra.mxu0 0.0
      %99 = vmatpush.msra.mxu0 0.0
      %100 = vmatpush.msra.mxu0 0.0
      %101 = vmatpush.msra.mxu0 0.0
      %102 = vmatpush.msra.mxu0 0.0
      %103 = vmatpush.msra.mxu0 0.0
      %104 = vmatpush.msra.mxu0 0.0
      %105 = vmatpush.msra.mxu0 0.0
      %106 = vmatpush.msra.mxu0 0.0
      %107 = vmatpush.msra.mxu0 0.0
      %108 = vmatpush.msra.mxu0 %v91
      %109 = vmatmul.f32.gmra.mxu0 %v87
      %v110 = vpop.f32.mrf.mxu0
      %v111 = vadd.f32 %v83, %v110
      %112 = vdwg.mxu0
      %v113 = vmul.f32 %v111, 0.25
      %vm114 = vcmask 25600
      %v115 = vsel %vm114, %v113, -inf
      %116 = vmax.xlane.f32.xlu0 %v115
      %v117 = vpop.xlane.xlu0 %116
      %v118 = vsub.f32 %v113, %v117
      %v119 = vmul.f32 %v118, 1.442695
      %v120 = vpow.pop %v119
      %v121 = vsel %vm114, %v120, 0.0
      %122 = vadd.xlane.f32.xlu0 %v121
      %v123 = vpop.xlane.xlu0 %122
      %v124 = vrcp.pop %v123
      %v125 = vmul.f32 %v123, %v124
      %v126 = vsub.f32 1.0, %v125
      %v127 = vmul.f32 %v124, %v126
      %v128 = vadd.f32 %v124, %v127
      %vm129 = vweird.f32 %v123
      %vm130 = vweird.f32 %v124
      %vm131 = vmor %vm129, %vm130
      %v132 = vsel %vm131, %v124, %v128
      %v133 = vand.u32 2147483647, %v123
      %vm134 = vcmp.eq.f32.partialorder %v133, 8.507059e+37
      %v135 = vand.u32 %v123, 2147483648
      %v136 = vor.u32 1.1754944e-38, %v135
      %v137 = vsel %vm134, %v136, %v132
      %v138 = vmul.f32 %v120, %v137
      %139 = vst.msk [vmem:[#allocation6] sm:$0x3] %vm114, %v138
    $region33: #{tpu_custom_call.1} parent=1 // pred_fallthru
      _
    // Predicated region
    $region34: #{tpu_custom_call.1} parent=1 // pred_check
      _
    $region35: #{tpu_custom_call.1} parent=1 // pred_check_branch
      %141 = sbr.rel (0) target = $region37
    $region36: #{tpu_custom_call.1} parent=1 // pred_region
      %143 = vsyncadd [#allocation5], 0
      %s145 = sshll.u32 [#allocation6], 4
      %s146 = int_to_ptr.vmem [resolvable:$true] %s145
      %s147 = sshll.u32 %s5, 4
      %s148 = int_to_ptr.hbm [resolvable:$true] %s147
      %150 = dma.vmem_to_hbm [thread:$0]  %s146, 32, %s148, [#allocation5]
    $region37: #{tpu_custom_call.1} parent=1 // pred_fallthru
      _
    // Predicated region
    $region38: #{tpu_custom_call.1} parent=1 // pred_check
      _
    $region39: #{tpu_custom_call.1} parent=1 // pred_check_branch
      %152 = sbr.rel (0) target = $region41
    $region40: #{tpu_custom_call.1} parent=1 // pred_region
      %154 = dma.done [#allocation5], 32
    $region41: #{tpu_custom_call.1} parent=1 // pred_fallthru
      _
    %155 = vsyncpa [#allocation4], 1
    %156 = vsyncpa [#allocation5], 1

// kernel: tpu_custom_call.1
$region0: #{tpu_custom_call.1}
  #allocation0 [shape = 'u32[]', space=smem, size = 0x4, offset = 0x4, fixed_abs, tag = 'smem constant byte address 0x4 - core index']
  #allocation1 [shape = 'u32[72,128]{1,0:T(1,128)}', space=vmem, size = 0x9000, scoped, tag = 'internal scratch']
  #allocation2 [shape = 'f32[8,128]{1,0:T(8,128)}', space=vmem, size = 0x1000, scoped, tag = 'scratch operand']
  %s0 = inlined_call_operand.hbm [shape: f32[8,256], index: 0, kind: input, shape index: {}]
  %s1 = inlined_call_operand.vmem [shape: f32[8,2], index: 1, kind: input, shape index: {}]
  %s2 = inlined_call_operand.vmem [shape: f32[2,4], index: 2, kind: input, shape index: {}]
  %s3 = inlined_call_operand.vmem [shape: f32[1,4], index: 3, kind: input, shape index: {}]
  %s4 = inlined_call_operand.vmem [shape: f32[2,8], index: 4, kind: input, shape index: {}]
  %s5 = inlined_call_operand.hbm [shape: f32[1,2,4], index: 5, kind: output, shape index: {}]
  %s6 = sld [smem:[#allocation0]]
  $region42: #{tpu_custom_call.1} parent=0
    _
  %s8 = ssub.s32 1, %s6
  %s9 = scalar_select 0, %s8, %s6
  $region1: #{tpu_custom_call.1} parent=0
    #allocation3 [shape = 'u8[8192]{0}', space=vmem, size = 0x2000, scoped, tag = 'input window, operand 0, single buffered']
    #allocation4 [shape = 's32[1]{0}', space=sflag, size = 0x4, scoped, tag = 'scoped memory for tpu_custom_call.1']
    #allocation5 [shape = 's32[1]{0}', space=sflag, size = 0x4, scoped, tag = 'scoped memory for tpu_custom_call.1']
    #allocation6 [shape = 'u8[1024]{0}', space=vmem, size = 0x400, scoped, tag = 'output window, operand 0, single buffered']
    %10 = vsyncpa [#allocation4], 0
    %11 = vsyncpa [#allocation5], 0
    // Predicated region
    $region2: #{tpu_custom_call.1} parent=1 // pred_check
      _
    $region3: #{tpu_custom_call.1} parent=1 // pred_check_branch
      %13 = sbr.rel (0) target = $region5
    $region4: #{tpu_custom_call.1} parent=1 // pred_region
      %15 = vsyncadd [#allocation4], 0
      %s17 = sshll.u32 %s0, 4
      %s18 = int_to_ptr.hbm [resolvable:$true] %s17
      %s19 = sshll.u32 [#allocation3], 4
      %s20 = int_to_ptr.vmem [resolvable:$true] %s19
      %22 = dma.hbm_to_vmem [thread:$0]  %s18, 256, %s20, [#allocation4]
    $region5: #{tpu_custom_call.1} parent=1 // pred_fallthru
      _
    // Predicated region
    $region6: #{tpu_custom_call.1} parent=1 // pred_check
      _
    $region7: #{tpu_custom_call.1} parent=1 // pred_check_branch
      %24 = sbr.rel (0) target = $region9
    $region8: #{tpu_custom_call.1} parent=1 // pred_region
      _
    $region9: #{tpu_custom_call.1} parent=1 // pred_fallthru
      _
    // Predicated region
    $region10: #{tpu_custom_call.1} parent=1 // pred_check
      _
    $region11: #{tpu_custom_call.1} parent=1 // pred_check_branch
      %26 = sbr.rel (0) target = $region13
    $region12: #{tpu_custom_call.1} parent=1 // pred_region
      _
    $region13: #{tpu_custom_call.1} parent=1 // pred_fallthru
      _
    // Predicated region
    $region14: #{tpu_custom_call.1} parent=1 // pred_check
      _
    $region15: #{tpu_custom_call.1} parent=1 // pred_check_branch
      %28 = sbr.rel (0) target = $region17
    $region16: #{tpu_custom_call.1} parent=1 // pred_region
      _
    $region17: #{tpu_custom_call.1} parent=1 // pred_fallthru
      _
    // Predicated region
    $region18: #{tpu_custom_call.1} parent=1 // pred_check
      _
    $region19: #{tpu_custom_call.1} parent=1 // pred_check_branch
      %30 = sbr.rel (0) target = $region21
    $region20: #{tpu_custom_call.1} parent=1 // pred_region
      _
    $region21: #{tpu_custom_call.1} parent=1 // pred_fallthru
      _
    // Predicated region
    $region22: #{tpu_custom_call.1} parent=1 // pred_check
      _
    $region23: #{tpu_custom_call.1} parent=1 // pred_check_branch
      %32 = sbr.rel (0) target = $region25
    $region24: #{tpu_custom_call.1} parent=1 // pred_region
      %34 = dma.done [#allocation4], 256
    $region25: #{tpu_custom_call.1} parent=1 // pred_fallthru
      _
    %p35 = scmp.eq.s32.totalorder 0, 0
    // Predicated region
    $region26: #{tpu_custom_call.1} parent=1 // pred_check
      %p36 = pneg %p35
    $region27: #{tpu_custom_call.1} parent=1 // pred_check_branch
      %38 = sbr.rel (%p36) target = $region29
    $region28: #{tpu_custom_call.1} parent=1 // pred_region
      %39 = vst [vmem:[#allocation2] sm:$0xff] 0.0
    $region29: #{tpu_custom_call.1} parent=1 // pred_fallthru
      _
    %v40 = vld [vmem:[#allocation3] sm:$0xff]
    %v41 = vld [vmem:[#allocation3 + $0x8] sm:$0xff]
    %v42 = vadd.f32 %v40, %v41
    %v43 = vld [vmem:[#allocation2] sm:$0xff]
    %v44 = vadd.f32 %v43, %v42
    %45 = vst [vmem:[#allocation2] sm:$0xff] %v44
    // Predicated region
    $region30: #{tpu_custom_call.1} parent=1 // pred_check
      %p46 = pneg %p35
    $region31: #{tpu_custom_call.1} parent=1 // pred_check_branch
      %48 = sbr.rel (%p46) target = $region33
    $region32: #{tpu_custom_call.1} parent=1 // pred_region
      %v49 = vld [vmem:[#allocation2] sm:$0xff]
      %50 = vadd.xlane.f32.xlu0 %v49
      %v51 = vpop.xlane.xlu0 %50
      %v52 = vld [vmem:[%s4] sm:$0x3]
      %v53 = vld [vmem:[%s1] sm:$0xff]
      %v54 = vmul.f32 %v51, %v53
      %vm55 = vcmask 64512
      %v57 = vsel %vm55, %v52, 0
      %59 = vmatpush.msra.mxu0 0.0
      %60 = vmatpush.msra.mxu0 0.0
      %61 = vmatpush.msra.mxu0 0.0
      %62 = vmatpush.msra.mxu0 0.0
      %63 = vmatpush.msra.mxu0 0.0
      %64 = vmatpush.msra.mxu0 0.0
      %65 = vmatpush.msra.mxu0 0.0
      %66 = vmatpush.msra.mxu0 0.0
      %67 = vmatpush.msra.mxu0 0.0
      %68 = vmatpush.msra.mxu0 0.0
      %69 = vmatpush.msra.mxu0 0.0
      %70 = vmatpush.msra.mxu0 0.0
      %71 = vmatpush.msra.mxu0 0.0
      %72 = vmatpush.msra.mxu0 0.0
      %73 = vmatpush.msra.mxu0 0.0
      %74 = vmatpush.msra.mxu0 %v54
      %75 = vmatmul.f32.gmra.mxu0 %v57
      %v76 = vpop.f32.mrf.mxu0
      %v77 = vadd.f32 0.0, %v76
      %78 = vdwg.mxu0
      %v79 = vmax.f32 %v77, 0.0
      %v80 = vld [vmem:[%s2] sm:$0x3]
      %v81 = vld [vmem:[%s3] sm:$0x1]
      %v83 = vperm.slane %v81, 0
      %vm85 = vcmask 15360
      %v87 = vsel %vm85, %v79, 0
      %vm89 = vcmask 1041408
      %v91 = vsel %vm89, %v80, 0
      %93 = vmatpush.msra.mxu0 0.0
      %94 = vmatpush.msra.mxu0 0.0
      %95 = vmatpush.msra.mxu0 0.0
      %96 = vmatpush.msra.mxu0 0.0
      %97 = vmatpush.msra.mxu0 0.0
      %98 = vmatpush.msra.mxu0 0.0
      %99 = vmatpush.msra.mxu0 0.0
      %100 = vmatpush.msra.mxu0 0.0
      %101 = vmatpush.msra.mxu0 0.0
      %102 = vmatpush.msra.mxu0 0.0
      %103 = vmatpush.msra.mxu0 0.0
      %104 = vmatpush.msra.mxu0 0.0
      %105 = vmatpush.msra.mxu0 0.0
      %106 = vmatpush.msra.mxu0 0.0
      %107 = vmatpush.msra.mxu0 0.0
      %108 = vmatpush.msra.mxu0 %v91
      %109 = vmatmul.f32.gmra.mxu0 %v87
      %v110 = vpop.f32.mrf.mxu0
      %v111 = vadd.f32 %v83, %v110
      %112 = vdwg.mxu0
      %v113 = vmul.f32 %v111, 0.25
      %vm114 = vcmask 25600
      %v115 = vsel %vm114, %v113, -inf
      %116 = vmax.xlane.f32.xlu0 %v115
      %v117 = vpop.xlane.xlu0 %116
      %v118 = vsub.f32 %v113, %v117
      %v119 = vmul.f32 %v118, 1.442695
      %v120 = vpow.pop %v119
      %v121 = vsel %vm114, %v120, 0.0
      %122 = vadd.xlane.f32.xlu0 %v121
      %v123 = vpop.xlane.xlu0 %122
      %v124 = vrcp.pop %v123
      %v125 = vmul.f32 %v123, %v124
      %v126 = vsub.f32 1.0, %v125
      %v127 = vmul.f32 %v124, %v126
      %v128 = vadd.f32 %v124, %v127
      %vm129 = vweird.f32 %v123
      %vm130 = vweird.f32 %v124
      %vm131 = vmor %vm129, %vm130
      %v132 = vsel %vm131, %v124, %v128
      %v133 = vand.u32 2147483647, %v123
      %vm134 = vcmp.eq.f32.partialorder %v133, 8.507059e+37
      %v135 = vand.u32 %v123, 2147483648
      %v136 = vor.u32 1.1754944e-38, %v135
      %v137 = vsel %vm134, %v136, %v132
      %v138 = vmul.f32 %v120, %v137
      %139 = vst.msk [vmem:[#allocation6] sm:$0x3] %vm114, %v138
    $region33: #{tpu_custom_call.1} parent=1 // pred_fallthru
      _
    // Predicated region
    $region34: #{tpu_custom_call.1} parent=1 // pred_check
      _
    $region35: #{tpu_custom_call.1} parent=1 // pred_check_branch
      %141 = sbr.rel (0) target = $region37
    $region36: #{tpu_custom_call.1} parent=1 // pred_region
      %143 = vsyncadd [#allocation5], 0
      %s145 = sshll.u32 [#allocation6], 4
      %s146 = int_to_ptr.vmem [resolvable:$true] %s145
      %s147 = sshll.u32 %s5, 4
      %s148 = int_to_ptr.hbm [resolvable:$true] %s147
      %150 = dma.vmem_to_hbm [thread:$0]  %s146, 32, %s148, [#allocation5]
    $region37: #{tpu_custom_call.1} parent=1 // pred_fallthru
      _
    // Predicated region
    $region38: #{tpu_custom_call.1} parent=1 // pred_check
      _
    $region39: #{tpu_custom_call.1} parent=1 // pred_check_branch
      %152 = sbr.rel (0) target = $region41
    $region40: #{tpu_custom_call.1} parent=1 // pred_region
      %154 = dma.done [#allocation5], 32
    $region41: #{tpu_custom_call.1} parent=1 // pred_fallthru
      _
    %155 = vsyncpa [#allocation4], 1
    %156 = vsyncpa [#allocation5], 1

</llo_original>
